<compile_context>
chip_gen: v6e
topology: v6e:2x2x1
jax: 0.10.0
libtpu: 0.0.40
codegen_flags: <defaults>
</compile_context>

<pallas_src>
import math

import jax
import jax.numpy as jnp
from jax.experimental import pallas as pl
from jax.experimental.pallas import tpu as pltpu

EPSILON = 1e-08


def _round_up(x, m):
    return ((x + m - 1) // m) * m


def f1_kernel(x_ref, r_ref, w1_ref, b1_ref, w2e_ref, b2e_ref, e2_ref, out_ref):
    # x_ref   : [tm, Din]  (f32 or bf16)      r_ref  : [tm, 3]   (f32)
    # w1_ref  : [Din, H]                      b1_ref : [1, H]    (f32)
    # w2e_ref : [H, Dout*3]  (W2^T expanded)  b2e_ref: [1, Dout*3] (f32)
    # e2_ref  : [3, Dout*3]  unit-vector expansion selector (e2[k, c*3+k] = 1)
    # out_ref : [tm, Dout*3]
    f32 = jnp.float32
    x = x_ref[...]

    # RadialFunction: two-layer MLP with ReLU (MXU matmuls, f32 accumulation).
    h = jnp.dot(x, w1_ref[...], preferred_element_type=f32) + b1_ref[...]
    h = jnp.maximum(h, 0.0)
    # second layer directly produces the lane-flattened [tm, Dout*3] layout
    radial_e = jnp.dot(h.astype(w2e_ref.dtype), w2e_ref[...],
                       preferred_element_type=f32) + b2e_ref[...]          # [tm, Dout*3]

    # distances / unit vectors (rsqrt -> EUP; mask on squared norm, no sqrt/divide).
    r = r_ref[...].astype(f32)                                             # [tm, 3]
    sq = jnp.sum(r * r, axis=-1, keepdims=True)                            # [tm, 1]
    unit = r * jax.lax.rsqrt(jnp.maximum(sq, EPSILON))                     # [tm, 3]
    unit_e = jnp.dot(unit, e2_ref[...], preferred_element_type=f32)        # [tm, Dout*3]

    # where(dij < EPS, 0, radial) * unit   (dij < EPS  <=>  sq < EPS^2)
    scale = jnp.where(sq < EPSILON * EPSILON, 0.0, 1.0)                    # [tm, 1]
    out_ref[...] = (radial_e * unit_e * scale).astype(out_ref.dtype)


def f1_forward(inputs, rij, w1, b1, w2, b2, *, tm=2048,
               compute_dtype=None, out_dtype=None):
    """inputs: [N1, N2, Din]; rij: [N1, N2, 3]; weights in PyTorch convention
    (w1: [H, Din], b1: [H], w2: [Dout, H], b2: [Dout]).  Returns [N1, N2, Dout, 3]."""
    N1, N2, Din = inputs.shape
    M = N1 * N2
    H = w1.shape[0]
    Dout = w2.shape[0]
    if out_dtype is None:
        out_dtype = inputs.dtype
    if compute_dtype is None:
        compute_dtype = inputs.dtype

    # ---- row-flatten the pair grid; geometry stays f32 (tiny stream, accuracy near r=0)
    x = inputs.reshape(M, Din).astype(compute_dtype)
    r = rij.reshape(M, 3).astype(jnp.float32)

    # ---- tile size: multiple of 8, never bigger than (padded) M; pad rows to a full grid
    tm = _round_up(max(8, min(int(tm), M)), 8)
    Mp = _round_up(M, tm)
    if Mp != M:
        x = jnp.pad(x, ((0, Mp - M), (0, 0)))
        r = jnp.pad(r, ((0, Mp - M), (0, 0)))
    grid = (Mp // tm,)

    # ---- parameters (resident in VMEM across the whole grid)
    w1t = jnp.transpose(w1).astype(compute_dtype)                          # [Din, H]
    b1r = b1.reshape(1, H).astype(jnp.float32)
    # expand layer 2 so the kernel's second matmul emits the flattened [*, Dout*3]
    # layout directly: flat column c*3+k carries output channel c.
    w2e = jnp.repeat(jnp.transpose(w2), 3, axis=1).astype(compute_dtype)   # [H, Dout*3]
    b2e = jnp.repeat(b2, 3).reshape(1, Dout * 3).astype(jnp.float32)
    # unit-vector expansion selector: unit_e[:, c*3+k] = unit[:, k]
    e2 = jnp.tile(jnp.eye(3, dtype=jnp.float32), (1, Dout))                # [3, Dout*3]

    bytes_accessed = int(
        Mp * (Din * jnp.dtype(compute_dtype).itemsize        # x stream
              + 3 * 4                                         # rij stream
              + Dout * 3 * jnp.dtype(out_dtype).itemsize))    # output stream
    flops = int(2 * Mp * (Din * H + H * Dout * 3 + 3 * Dout * 3))

    out = pl.pallas_call(
        f1_kernel,
        out_shape=jax.ShapeDtypeStruct((Mp, Dout * 3), out_dtype),
        grid_spec=pltpu.PrefetchScalarGridSpec(
            num_scalar_prefetch=0,
            grid=grid,
            in_specs=[
                pl.BlockSpec((tm, Din), lambda i: (i, 0)),        # x rows
                pl.BlockSpec((tm, 3), lambda i: (i, 0)),          # rij rows
                pl.BlockSpec((Din, H), lambda i: (0, 0)),         # W1^T   (resident)
                pl.BlockSpec((1, H), lambda i: (0, 0)),           # b1
                pl.BlockSpec((H, Dout * 3), lambda i: (0, 0)),    # W2^T expanded (resident)
                pl.BlockSpec((1, Dout * 3), lambda i: (0, 0)),    # b2 expanded
                pl.BlockSpec((3, Dout * 3), lambda i: (0, 0)),    # unit-expansion selector
            ],
            out_specs=pl.BlockSpec((tm, Dout * 3), lambda i: (i, 0)),
        ),
        compiler_params=pltpu.CompilerParams(
            dimension_semantics=("parallel",),
            vmem_limit_bytes=32 * 1024 * 1024,
        ),
        cost_estimate=pl.CostEstimate(
            flops=flops, transcendentals=int(Mp), bytes_accessed=bytes_accessed),
    )(x, r, w1t, b1r, w2e, b2e, e2)

    return out[:M].reshape(N1, N2, Dout, 3)


def xavier_uniform(key, shape):
    # matches torch.nn.init.xavier_uniform_ for a 2D [fan_out, fan_in] tensor
    fan_out, fan_in = shape
    bound = math.sqrt(6.0 / (fan_in + fan_out))
    return jax.random.uniform(key, shape, jnp.float32, -bound, bound)


def f1_reference(inputs, rij, w1, b1, w2, b2):
    h = jax.nn.relu(jnp.tensordot(inputs, w1, axes=([-1], [1])) + b1)
    radial = jnp.tensordot(h, w2, axes=([-1], [1])) + b2
    dij = jnp.linalg.norm(rij, axis=-1)
    masked = jnp.where(dij[..., None] < EPSILON, jnp.zeros_like(radial), radial)
    unit = rij / jnp.sqrt(jnp.maximum(jnp.sum(rij**2, axis=-1, keepdims=True), EPSILON))
    return unit[..., None, :] * masked[..., None]


if __name__ == "__main__":
    # small, deterministic shapes consistent with the module (pair grid [N, N]):
    N = 24               # -> M = 576 rows; with tm=128 the grid has 5 steps (exercises
    input_dim = 32       #    tiling, padding tail and pipelining on a small problem)
    hidden_dim = 32
    output_dim = 4

    key = jax.random.PRNGKey(0)
    k_in, k_pos, k_w1, k_w2, k_b1, k_b2 = jax.random.split(key, 6)

    # parameters (Xavier weights; module default init is zero biases, but use small
    # non-zero biases here so the bias/expansion code paths are actually exercised)
    w1 = xavier_uniform(k_w1, (hidden_dim, input_dim))
    b1 = 0.1 * jax.random.normal(k_b1, (hidden_dim,), jnp.float32)
    w2 = xavier_uniform(k_w2, (output_dim, hidden_dim))
    b2 = 0.1 * jax.random.normal(k_b2, (output_dim,), jnp.float32)

    # pairwise feature tensor [N, N, input_dim]
    inputs = jax.random.normal(k_in, (N, N, input_dim), jnp.float32)

    # rij from point positions so the diagonal is exactly zero (exercises the mask)
    pos = jax.random.normal(k_pos, (N, 3), jnp.float32)
    rij = pos[:, None, :] - pos[None, :, :]          # [N, N, 3]

    ref = f1_reference(inputs, rij, w1, b1, w2, b2)

    # f32 path (tight tolerance)
    out = jax.block_until_ready(f1_forward(inputs, rij, w1, b1, w2, b2, tm=128))
    assert out.shape == (N, N, output_dim, 3), out.shape
    assert jnp.allclose(out, ref, atol=1e-5, rtol=1e-5), "f32 mismatch vs reference"

    # bf16-streaming path (halves the dominant x / W HBM streams; f32 accumulation)
    out_bf16 = jax.block_until_ready(
        f1_forward(inputs, rij, w1, b1, w2, b2, tm=128, compute_dtype=jnp.bfloat16))
    assert jnp.allclose(out_bf16, ref, atol=5e-2, rtol=5e-2), "bf16 mismatch vs reference"

    print("KERNEL_OK")
</pallas_src>

<mosaic_0001>
module attributes {stable_mosaic.version = 11 : i64} {
  func.func @f1_kernel(%arg0: i32, %arg1: memref<128x32xf32, #tpu.memory_space<vmem>>, %arg2: memref<128x3xf32, #tpu.memory_space<vmem>>, %arg3: memref<32x32xf32, #tpu.memory_space<vmem>>, %arg4: memref<1x32xf32, #tpu.memory_space<vmem>>, %arg5: memref<32x12xf32, #tpu.memory_space<vmem>>, %arg6: memref<1x12xf32, #tpu.memory_space<vmem>>, %arg7: memref<3x12xf32, #tpu.memory_space<vmem>>, %arg8: memref<128x12xf32, #tpu.memory_space<vmem>>) attributes {dimension_semantics = [#tpu.dimension_semantics<parallel>], iteration_bounds = array<i64: 5>, scalar_prefetch = 0 : i64, scratch_operands = 0 : i64, tpu.core_type = #tpu.core_type<tc>, window_params = [{transform_indices = @transform_0, window_bounds = array<i64: 128, 32>}, {transform_indices = @transform_1, window_bounds = array<i64: 128, 3>}, {pipeline_mode = #tpu.pipeline_mode<synchronous>, transform_indices = @transform_2, window_bounds = array<i64: 32, 32>}, {pipeline_mode = #tpu.pipeline_mode<synchronous>, transform_indices = @transform_3, window_bounds = array<i64: 1, 32>}, {pipeline_mode = #tpu.pipeline_mode<synchronous>, transform_indices = @transform_4, window_bounds = array<i64: 32, 12>}, {pipeline_mode = #tpu.pipeline_mode<synchronous>, transform_indices = @transform_5, window_bounds = array<i64: 1, 12>}, {pipeline_mode = #tpu.pipeline_mode<synchronous>, transform_indices = @transform_6, window_bounds = array<i64: 3, 12>}, {transform_indices = @transform_7, window_bounds = array<i64: 128, 12>}]} {
    %c0 = arith.constant 0 : index
    %c0_0 = arith.constant 0 : index
    %0 = vector.load %arg1[%c0, %c0_0] : memref<128x32xf32, #tpu.memory_space<vmem>>, vector<128x32xf32>
    %c0_1 = arith.constant 0 : index
    %c0_2 = arith.constant 0 : index
    %1 = vector.load %arg3[%c0_1, %c0_2] : memref<32x32xf32, #tpu.memory_space<vmem>>, vector<32x32xf32>
    %cst = arith.constant dense<0.000000e+00> : vector<128x32xf32>
    %2 = tpu.matmul %0, %1, %cst {dimension_numbers = #tpu.dot_dimension_numbers<[1], [0], [0], [1], [0, 0, 1, 1], [], []>} : vector<128x32xf32>, vector<32x32xf32>, vector<128x32xf32> -> vector<128x32xf32>
    %c0_3 = arith.constant 0 : index
    %c0_4 = arith.constant 0 : index
    %3 = vector.load %arg4[%c0_3, %c0_4] : memref<1x32xf32, #tpu.memory_space<vmem>>, vector<1x32xf32>
    %4 = vector.broadcast %3 : vector<1x32xf32> to vector<128x32xf32>
    %5 = arith.addf %2, %4 : vector<128x32xf32>
    %cst_5 = arith.constant 0.000000e+00 : f32
    %6 = vector.broadcast %cst_5 : f32 to vector<128x32xf32>
    %7 = arith.maximumf %5, %6 : vector<128x32xf32>
    %c0_6 = arith.constant 0 : index
    %c0_7 = arith.constant 0 : index
    %8 = vector.load %arg5[%c0_6, %c0_7] : memref<32x12xf32, #tpu.memory_space<vmem>>, vector<32x12xf32>
    %cst_8 = arith.constant dense<0.000000e+00> : vector<128x12xf32>
    %9 = tpu.matmul %7, %8, %cst_8 {dimension_numbers = #tpu.dot_dimension_numbers<[1], [0], [0], [1], [0, 0, 1, 1], [], []>} : vector<128x32xf32>, vector<32x12xf32>, vector<128x12xf32> -> vector<128x12xf32>
    %c0_9 = arith.constant 0 : index
    %c0_10 = arith.constant 0 : index
    %10 = vector.load %arg6[%c0_9, %c0_10] : memref<1x12xf32, #tpu.memory_space<vmem>>, vector<1x12xf32>
    %11 = vector.broadcast %10 : vector<1x12xf32> to vector<128x12xf32>
    %12 = arith.addf %9, %11 : vector<128x12xf32>
    %c0_11 = arith.constant 0 : index
    %c0_12 = arith.constant 0 : index
    %13 = vector.load %arg2[%c0_11, %c0_12] : memref<128x3xf32, #tpu.memory_space<vmem>>, vector<128x3xf32>
    %14 = arith.mulf %13, %13 : vector<128x3xf32>
    %cst_13 = arith.constant dense<0.000000e+00> : vector<128xf32>
    %15 = vector.multi_reduction <add>, %14, %cst_13 [1] : vector<128x3xf32> to vector<128xf32>
    %16 = vector.shape_cast %15 : vector<128xf32> to vector<128x1xf32>
    %cst_14 = arith.constant 9.99999993E-9 : f32
    %17 = vector.broadcast %cst_14 : f32 to vector<128x1xf32>
    %18 = arith.maximumf %16, %17 : vector<128x1xf32>
    %19 = math.rsqrt %18 : vector<128x1xf32>
    %20 = vector.broadcast %19 : vector<128x1xf32> to vector<128x3xf32>
    %21 = arith.mulf %13, %20 : vector<128x3xf32>
    %c0_15 = arith.constant 0 : index
    %c0_16 = arith.constant 0 : index
    %22 = vector.load %arg7[%c0_15, %c0_16] : memref<3x12xf32, #tpu.memory_space<vmem>>, vector<3x12xf32>
    %cst_17 = arith.constant dense<0.000000e+00> : vector<128x12xf32>
    %23 = tpu.matmul %21, %22, %cst_17 {dimension_numbers = #tpu.dot_dimension_numbers<[1], [0], [0], [1], [0, 0, 1, 1], [], []>} : vector<128x3xf32>, vector<3x12xf32>, vector<128x12xf32> -> vector<128x12xf32>
    %cst_18 = arith.constant 1.000000e-16 : f32
    %24 = vector.broadcast %cst_18 : f32 to vector<128x1xf32>
    %25 = arith.cmpf olt, %16, %24 : vector<128x1xf32>
    %cst_19 = arith.constant 0.000000e+00 : f32
    %cst_20 = arith.constant 1.000000e+00 : f32
    %26 = vector.broadcast %cst_19 : f32 to vector<128x1xf32>
    %27 = vector.broadcast %cst_20 : f32 to vector<128x1xf32>
    %28 = arith.select %25, %26, %27 : vector<128x1xi1>, vector<128x1xf32>
    %29 = arith.mulf %12, %23 : vector<128x12xf32>
    %30 = vector.broadcast %28 : vector<128x1xf32> to vector<128x12xf32>
    %31 = arith.mulf %29, %30 : vector<128x12xf32>
    %c0_21 = arith.constant 0 : index
    %c0_22 = arith.constant 0 : index
    %32 = vector.load %arg8[%c0_21, %c0_22] : memref<128x12xf32, #tpu.memory_space<vmem>>, vector<128x12xf32>
    tpu.vector_store %arg8[%c0_21, %c0_22], %31 {strides = array<i32>} : memref<128x12xf32, #tpu.memory_space<vmem>>, vector<128x12xf32>,
    return
  }
  func.func @transform_0(%arg0: i32) -> (i32, i32) {
    %c0_i32 = arith.constant 0 : i32
    %c0_i32_0 = arith.constant 0 : i32
    return %arg0, %c0_i32 : i32, i32
  }
  func.func @transform_1(%arg0: i32) -> (i32, i32) {
    %c0_i32 = arith.constant 0 : i32
    %c0_i32_0 = arith.constant 0 : i32
    return %arg0, %c0_i32 : i32, i32
  }
  func.func @transform_2(%arg0: i32) -> (i32, i32) {
    %c0_i32 = arith.constant 0 : i32
    %c0_i32_0 = arith.constant 0 : i32
    %c0_i32_1 = arith.constant 0 : i32
    return %c0_i32, %c0_i32_0 : i32, i32
  }
  func.func @transform_3(%arg0: i32) -> (i32, i32) {
    %c0_i32 = arith.constant 0 : i32
    %c0_i32_0 = arith.constant 0 : i32
    %c0_i32_1 = arith.constant 0 : i32
    return %c0_i32, %c0_i32_0 : i32, i32
  }
  func.func @transform_4(%arg0: i32) -> (i32, i32) {
    %c0_i32 = arith.constant 0 : i32
    %c0_i32_0 = arith.constant 0 : i32
    %c0_i32_1 = arith.constant 0 : i32
    return %c0_i32, %c0_i32_0 : i32, i32
  }
  func.func @transform_5(%arg0: i32) -> (i32, i32) {
    %c0_i32 = arith.constant 0 : i32
    %c0_i32_0 = arith.constant 0 : i32
    %c0_i32_1 = arith.constant 0 : i32
    return %c0_i32, %c0_i32_0 : i32, i32
  }
  func.func @transform_6(%arg0: i32) -> (i32, i32) {
    %c0_i32 = arith.constant 0 : i32
    %c0_i32_0 = arith.constant 0 : i32
    %c0_i32_1 = arith.constant 0 : i32
    return %c0_i32, %c0_i32_0 : i32, i32
  }
  func.func @transform_7(%arg0: i32) -> (i32, i32) {
    %c0_i32 = arith.constant 0 : i32
    %c0_i32_0 = arith.constant 0 : i32
    return %arg0, %c0_i32 : i32, i32
  }
}

</mosaic_0001>

<llo_original>
// kernel: tpu_custom_call.1
$region0: #{tpu_custom_call.1}
  #allocation0 [shape = 'u32[]', space=smem, size = 0x4, offset = 0x4, fixed_abs, tag = 'smem constant byte address 0x4 - core index']
  #allocation1 [shape = 'u32[144,128]{1,0:T(1,128)}', space=vmem, size = 0x12000, scoped, tag = 'internal scratch']
  %s0 = inlined_call_operand.vmem [shape: f32[640,32], index: 0, kind: input, shape index: {}]
  %s1 = inlined_call_operand.vmem [shape: f32[640,3], index: 1, kind: input, shape index: {}]
  %s2 = inlined_call_operand.vmem [shape: f32[32,32], index: 2, kind: input, shape index: {}]
  %s3 = inlined_call_operand.vmem [shape: f32[1,32], index: 3, kind: input, shape index: {}]
  %s4 = inlined_call_operand.vmem [shape: f32[32,12], index: 4, kind: input, shape index: {}]
  %s5 = inlined_call_operand.vmem [shape: f32[1,12], index: 5, kind: input, shape index: {}]
  %s6 = inlined_call_operand.vmem [shape: f32[3,12], index: 6, kind: input, shape index: {}]
  %s7 = inlined_call_operand.vmem [shape: f32[640,12], index: 7, kind: output, shape index: {}]
  %s8 = sld [smem:[#allocation0]]
  $region61: #{tpu_custom_call.1} parent=0
    _
  %s10 = ssub.s32 1, %s8
  %s11 = scalar_select 0, %s10, %s8
  loop: start=0, step=1, limit=7
  $region2: #{tpu_custom_call.1} parent=0 // loop_pre_header
    _
  $region3: #{tpu_custom_call.1} parent=0 // loop_header
    %s13 = sphi 0, %s17
    %p14 = scmp.ge.s32.totalorder %s13, 7
    %s23 = sphi 0, %s25
    %s26 = sphi 0, %s23
    %s27 = sphi 0, %s26
    %s43 = sphi 0, %s27
    %s49 = sphi 0, %s51
    %s52 = sphi 0, %s49
    %s53 = sphi 0, %s52
    %s69 = sphi 0, %s53
    %s73 = sphi 0, %s73
    %s75 = sphi 0, %s73
    %s76 = sphi 0, %s75
    %s90 = sphi 0, %s76
    %s94 = sphi 0, %s94
    %s96 = sphi 0, %s94
    %s97 = sphi 0, %s96
    %s111 = sphi 0, %s97
    %s115 = sphi 0, %s115
    %s117 = sphi 0, %s115
    %s118 = sphi 0, %s117
    %s132 = sphi 0, %s118
    %s136 = sphi 0, %s136
    %s138 = sphi 0, %s136
    %s139 = sphi 0, %s138
    %s153 = sphi 0, %s139
    %s157 = sphi 0, %s157
    %s159 = sphi 0, %s157
    %s160 = sphi 0, %s159
    %s174 = sphi 0, %s160
    %s180 = sphi 0, %s182
    %s183 = sphi 0, %s180
    %s184 = sphi 0, %s183
    %s200 = sphi 0, %s184
  $region4: #{tpu_custom_call.1} parent=0 // loop_header_branch
    %16 = sbr.rel (%p14) target = $region8
  $region5: #{tpu_custom_call.1} parent=0 // loop_body
    %s18 = ssub.s32 %s13, 1
    %s19 = ssub.s32 %s13, 2
    %s20 = sadd.s32 %s13, 1
    %s21 = ssub.s32 %s13, %s20
    %p22 = scmp.eq.s32.totalorder %s21, 0
    %s24 = sadd.s32 %s23, 1
    %s25 = scalar_select %p22, %s23, %s24
    %p28 = pneg %p22
    %p29 = scmp.eq.s32.totalorder %s13, 4
    %p30 = por %p28, %p29
    %p31 = scmp.ne.s32.totalorder %s23, %s26
    %p32 = scmp.eq.s32.totalorder %s13, 0
    %p33 = por %p31, %p32
    %p34 = scmp.ne.s32.totalorder %s23, %s26
    %p35 = scmp.eq.s32.totalorder %s18, 4
    %p36 = por %p34, %p35
    %p37 = scmp.ne.s32.totalorder %s26, %s27
    %p38 = scmp.eq.s32.totalorder %s18, 0
    %p39 = por %p37, %p38
    %p40 = scmp.ne.s32.totalorder %s26, %s27
    %p41 = scmp.eq.s32.totalorder %s19, 4
    %p42 = por %p40, %p41
    %p44 = scmp.ne.s32.totalorder %s27, %s43
    %p45 = scmp.eq.s32.totalorder %s19, 0
    %p46 = por %p44, %p45
    %s47 = ssub.s32 %s13, %s20
    %p48 = scmp.eq.s32.totalorder %s47, 0
    %s50 = sadd.s32 %s49, 1
    %s51 = scalar_select %p48, %s49, %s50
    %p54 = pneg %p48
    %p55 = scmp.eq.s32.totalorder %s13, 4
    %p56 = por %p54, %p55
    %p57 = scmp.ne.s32.totalorder %s49, %s52
    %p58 = scmp.eq.s32.totalorder %s13, 0
    %p59 = por %p57, %p58
    %p60 = scmp.ne.s32.totalorder %s49, %s52
    %p61 = scmp.eq.s32.totalorder %s18, 4
    %p62 = por %p60, %p61
    %p63 = scmp.ne.s32.totalorder %s52, %s53
    %p64 = scmp.eq.s32.totalorder %s18, 0
    %p65 = por %p63, %p64
    %p66 = scmp.ne.s32.totalorder %s52, %s53
    %p67 = scmp.eq.s32.totalorder %s19, 4
    %p68 = por %p66, %p67
    %p70 = scmp.ne.s32.totalorder %s53, %s69
    %p71 = scmp.eq.s32.totalorder %s19, 0
    %p72 = por %p70, %p71
    %s74 = sadd.s32 %s73, 1
    %p77 = scmp.eq.s32.totalorder %s13, 4
    %p78 = scmp.ne.s32.totalorder %s73, %s75
    %p79 = scmp.eq.s32.totalorder %s13, 0
    %p80 = por %p78, %p79
    %p81 = scmp.ne.s32.totalorder %s73, %s75
    %p82 = scmp.eq.s32.totalorder %s18, 4
    %p83 = por %p81, %p82
    %p84 = scmp.ne.s32.totalorder %s75, %s76
    %p85 = scmp.eq.s32.totalorder %s18, 0
    %p86 = por %p84, %p85
    %p87 = scmp.ne.s32.totalorder %s75, %s76
    %p88 = scmp.eq.s32.totalorder %s19, 4
    %p89 = por %p87, %p88
    %p91 = scmp.ne.s32.totalorder %s76, %s90
    %p92 = scmp.eq.s32.totalorder %s19, 0
    %p93 = por %p91, %p92
    %s95 = sadd.s32 %s94, 1
    %p98 = scmp.eq.s32.totalorder %s13, 4
    %p99 = scmp.ne.s32.totalorder %s94, %s96
    %p100 = scmp.eq.s32.totalorder %s13, 0
    %p101 = por %p99, %p100
    %p102 = scmp.ne.s32.totalorder %s94, %s96
    %p103 = scmp.eq.s32.totalorder %s18, 4
    %p104 = por %p102, %p103
    %p105 = scmp.ne.s32.totalorder %s96, %s97
    %p106 = scmp.eq.s32.totalorder %s18, 0
    %p107 = por %p105, %p106
    %p108 = scmp.ne.s32.totalorder %s96, %s97
    %p109 = scmp.eq.s32.totalorder %s19, 4
    %p110 = por %p108, %p109
    %p112 = scmp.ne.s32.totalorder %s97, %s111
    %p113 = scmp.eq.s32.totalorder %s19, 0
    %p114 = por %p112, %p113
    %s116 = sadd.s32 %s115, 1
    %p119 = scmp.eq.s32.totalorder %s13, 4
    %p120 = scmp.ne.s32.totalorder %s115, %s117
    %p121 = scmp.eq.s32.totalorder %s13, 0
    %p122 = por %p120, %p121
    %p123 = scmp.ne.s32.totalorder %s115, %s117
    %p124 = scmp.eq.s32.totalorder %s18, 4
    %p125 = por %p123, %p124
    %p126 = scmp.ne.s32.totalorder %s117, %s118
    %p127 = scmp.eq.s32.totalorder %s18, 0
    %p128 = por %p126, %p127
    %p129 = scmp.ne.s32.totalorder %s117, %s118
    %p130 = scmp.eq.s32.totalorder %s19, 4
    %p131 = por %p129, %p130
    %p133 = scmp.ne.s32.totalorder %s118, %s132
    %p134 = scmp.eq.s32.totalorder %s19, 0
    %p135 = por %p133, %p134
    %s137 = sadd.s32 %s136, 1
    %p140 = scmp.eq.s32.totalorder %s13, 4
    %p141 = scmp.ne.s32.totalorder %s136, %s138
    %p142 = scmp.eq.s32.totalorder %s13, 0
    %p143 = por %p141, %p142
    %p144 = scmp.ne.s32.totalorder %s136, %s138
    %p145 = scmp.eq.s32.totalorder %s18, 4
    %p146 = por %p144, %p145
    %p147 = scmp.ne.s32.totalorder %s138, %s139
    %p148 = scmp.eq.s32.totalorder %s18, 0
    %p149 = por %p147, %p148
    %p150 = scmp.ne.s32.totalorder %s138, %s139
    %p151 = scmp.eq.s32.totalorder %s19, 4
    %p152 = por %p150, %p151
    %p154 = scmp.ne.s32.totalorder %s139, %s153
    %p155 = scmp.eq.s32.totalorder %s19, 0
    %p156 = por %p154, %p155
    %s158 = sadd.s32 %s157, 1
    %p161 = scmp.eq.s32.totalorder %s13, 4
    %p162 = scmp.ne.s32.totalorder %s157, %s159
    %p163 = scmp.eq.s32.totalorder %s13, 0
    %p164 = por %p162, %p163
    %p165 = scmp.ne.s32.totalorder %s157, %s159
    %p166 = scmp.eq.s32.totalorder %s18, 4
    %p167 = por %p165, %p166
    %p168 = scmp.ne.s32.totalorder %s159, %s160
    %p169 = scmp.eq.s32.totalorder %s18, 0
    %p170 = por %p168, %p169
    %p171 = scmp.ne.s32.totalorder %s159, %s160
    %p172 = scmp.eq.s32.totalorder %s19, 4
    %p173 = por %p171, %p172
    %p175 = scmp.ne.s32.totalorder %s160, %s174
    %p176 = scmp.eq.s32.totalorder %s19, 0
    %p177 = por %p175, %p176
    %s178 = ssub.s32 %s13, %s20
    %p179 = scmp.eq.s32.totalorder %s178, 0
    %s181 = sadd.s32 %s180, 1
    %s182 = scalar_select %p179, %s180, %s181
    %p185 = pneg %p179
    %p186 = scmp.eq.s32.totalorder %s13, 4
    %p187 = por %p185, %p186
    %p188 = scmp.ne.s32.totalorder %s180, %s183
    %p189 = scmp.eq.s32.totalorder %s13, 0
    %p190 = por %p188, %p189
    %p191 = scmp.ne.s32.totalorder %s180, %s183
    %p192 = scmp.eq.s32.totalorder %s18, 4
    %p193 = por %p191, %p192
    %p194 = scmp.ne.s32.totalorder %s183, %s184
    %p195 = scmp.eq.s32.totalorder %s18, 0
    %p196 = por %p194, %p195
    %p197 = scmp.ne.s32.totalorder %s183, %s184
    %p198 = scmp.eq.s32.totalorder %s19, 4
    %p199 = por %p197, %p198
    %p201 = scmp.ne.s32.totalorder %s184, %s200
    %p202 = scmp.eq.s32.totalorder %s19, 0
    %p203 = por %p201, %p202
    %p204 = scmp.le.s32.totalorder 1, %s13
    %p205 = scmp.lt.s32.totalorder %s13, 6
    %p206 = pnand %p204, %p205
    %p207 = pneg %p206
    // Predicated region
    $region9: #{tpu_custom_call.1} parent=5 // pred_check
      _
    $region10: #{tpu_custom_call.1} parent=5 // pred_check_branch
      %209 = sbr.rel (%p206) target = $region12
    $region11: #{tpu_custom_call.1} parent=5 // pred_region
      %s210 = ssub.s32 %s13, 1
      // Predicated region
      $region13: #{tpu_custom_call.1} parent=11 // pred_check
        %p211 = pneg %p86
      $region14: #{tpu_custom_call.1} parent=11 // pred_check_branch
        %213 = sbr.rel (%p211) target = $region16
      $region15: #{tpu_custom_call.1} parent=11 // pred_region
        _
      $region16: #{tpu_custom_call.1} parent=11 // pred_fallthru
        _
      // Predicated region
      $region17: #{tpu_custom_call.1} parent=11 // pred_check
        %p214 = pneg %p107
      $region18: #{tpu_custom_call.1} parent=11 // pred_check_branch
        %216 = sbr.rel (%p214) target = $region20
      $region19: #{tpu_custom_call.1} parent=11 // pred_region
        _
      $region20: #{tpu_custom_call.1} parent=11 // pred_fallthru
        _
      // Predicated region
      $region21: #{tpu_custom_call.1} parent=11 // pred_check
        %p217 = pneg %p128
      $region22: #{tpu_custom_call.1} parent=11 // pred_check_branch
        %219 = sbr.rel (%p217) target = $region24
      $region23: #{tpu_custom_call.1} parent=11 // pred_region
        _
      $region24: #{tpu_custom_call.1} parent=11 // pred_fallthru
        _
      // Predicated region
      $region25: #{tpu_custom_call.1} parent=11 // pred_check
        %p220 = pneg %p149
      $region26: #{tpu_custom_call.1} parent=11 // pred_check_branch
        %222 = sbr.rel (%p220) target = $region28
      $region27: #{tpu_custom_call.1} parent=11 // pred_region
        _
      $region28: #{tpu_custom_call.1} parent=11 // pred_fallthru
        _
      // Predicated region
      $region29: #{tpu_custom_call.1} parent=11 // pred_check
        %p223 = pneg %p170
      $region30: #{tpu_custom_call.1} parent=11 // pred_check_branch
        %225 = sbr.rel (%p223) target = $region32
      $region31: #{tpu_custom_call.1} parent=11 // pred_region
        _
      $region32: #{tpu_custom_call.1} parent=11 // pred_fallthru
        _
    $region12: #{tpu_custom_call.1} parent=5 // pred_fallthru
      _
    %p226 = scmp.lt.s32.totalorder %s13, 5
    // Predicated region
    $region33: #{tpu_custom_call.1} parent=5 // pred_check
      %p227 = pneg %p226
    $region34: #{tpu_custom_call.1} parent=5 // pred_check_branch
      %229 = sbr.rel (%p227) target = $region36
    $region35: #{tpu_custom_call.1} parent=5 // pred_region
      // Predicated region
      $region37: #{tpu_custom_call.1} parent=35 // pred_check
        %p230 = pneg %p33
      $region38: #{tpu_custom_call.1} parent=35 // pred_check_branch
        %232 = sbr.rel (%p230) target = $region40
      $region39: #{tpu_custom_call.1} parent=35 // pred_region
        %s233 = smul.u32 16, %s13
        %p234 = scmp.lt.s32.totalorder %s233, 79
        %s235 = scalar_select %p234, %s233, 79
        %s236 = smul.addr %s235, 8
        %s237 = scalar_lea.vmem %s0, %s236
        %s238 = smul.u32 16, %s13
      $region40: #{tpu_custom_call.1} parent=35 // pred_fallthru
        _
      // Predicated region
      $region41: #{tpu_custom_call.1} parent=35 // pred_check
        %p239 = pneg %p59
      $region42: #{tpu_custom_call.1} parent=35 // pred_check_branch
        %241 = sbr.rel (%p239) target = $region44
      $region43: #{tpu_custom_call.1} parent=35 // pred_region
        %s242 = smul.u32 16, %s13
        %p243 = scmp.lt.s32.totalorder %s242, 79
        %s244 = scalar_select %p243, %s242, 79
        %s245 = smul.addr %s244, 8
        %s246 = scalar_lea.vmem %s1, %s245
        %s247 = smul.u32 16, %s13
      $region44: #{tpu_custom_call.1} parent=35 // pred_fallthru
        _
    $region36: #{tpu_custom_call.1} parent=5 // pred_fallthru
      _
    %p248 = scmp.le.s32.totalorder 1, %s13
    %p249 = scmp.lt.s32.totalorder %s13, 6
    %p250 = pnand %p248, %p249
    %p251 = pneg %p250
    // Predicated region
    $region45: #{tpu_custom_call.1} parent=5 // pred_check
      _
    $region46: #{tpu_custom_call.1} parent=5 // pred_check_branch
      %253 = sbr.rel (%p250) target = $region48
    $region47: #{tpu_custom_call.1} parent=5 // pred_region
      %s254 = ssub.s32 %s13, 1
      %s255 = smul.u32 16, %s18
      %p256 = scmp.lt.s32.totalorder %s255, 79
      %s257 = scalar_select %p256, %s255, 79
      %s258 = smul.addr %s257, 8
      %s259 = scalar_lea.vmem %s0, %s258
      %p260 = pneg %p39
      %p261 = pneg %p36
      %s262 = smul.u32 16, %s18
      %p263 = scmp.lt.s32.totalorder %s262, 79
      %s264 = scalar_select %p263, %s262, 79
      %s265 = smul.addr %s264, 8
      %s266 = scalar_lea.vmem %s1, %s265
      %p267 = pneg %p65
      %p268 = pneg %p62
      %p269 = pneg %p86
      %p270 = pneg %p83
      %p271 = pneg %p107
      %p272 = pneg %p104
      %p273 = pneg %p128
      %p274 = pneg %p125
      %p275 = pneg %p149
      %p276 = pneg %p146
      %p277 = pneg %p170
      %p278 = pneg %p167
      %p279 = pneg %p196
      %p280 = pneg %p193
      %s281 = smul.u32 16, %s18
      %p282 = scmp.lt.s32.totalorder %s281, 79
      %s283 = scalar_select %p282, %s281, 79
      %s284 = smul.addr %s283, 8
      %s285 = scalar_lea.vmem %s7, %s284
      %s286 = smul.u32 16, %s18
      %p287 = scmp.lt.s32.totalorder %s286, 79
      %s288 = scalar_select %p287, %s286, 79
      %s289 = smul.addr %s288, 8
      %s290 = scalar_lea.vmem %s0, %s289
      %s291 = smul.u32 16, %s18
      %s292 = smul.u32 16, %s18
      %p293 = scmp.lt.s32.totalorder %s292, 79
      %s294 = scalar_select %p293, %s292, 79
      %s295 = smul.addr %s294, 8
      %s296 = scalar_lea.vmem %s1, %s295
      %s297 = smul.u32 16, %s18
      %s298 = smul.u32 16, %s18
      %p299 = scmp.lt.s32.totalorder %s298, 79
      %s300 = scalar_select %p299, %s298, 79
      %s301 = smul.addr %s300, 8
      %s302 = scalar_lea.vmem %s7, %s301
      %s303 = smul.u32 16, %s18
      %v304 = vld [vmem:[%s290] sm:$0xff]
      %v305 = vld [vmem:[%s290 + $0x8] sm:$0xff]
      %v306 = vld [vmem:[%s290 + $0x10] sm:$0xff]
      %v307 = vld [vmem:[%s290 + $0x18] sm:$0xff]
      %v308 = vld [vmem:[%s290 + $0x20] sm:$0xff]
      %v309 = vld [vmem:[%s290 + $0x28] sm:$0xff]
      %v310 = vld [vmem:[%s290 + $0x30] sm:$0xff]
      %v311 = vld [vmem:[%s290 + $0x38] sm:$0xff]
      %v312 = vld [vmem:[%s290 + $0x40] sm:$0xff]
      %v313 = vld [vmem:[%s290 + $0x48] sm:$0xff]
      %v314 = vld [vmem:[%s290 + $0x50] sm:$0xff]
      %v315 = vld [vmem:[%s290 + $0x58] sm:$0xff]
      %v316 = vld [vmem:[%s290 + $0x60] sm:$0xff]
      %v317 = vld [vmem:[%s290 + $0x68] sm:$0xff]
      %v318 = vld [vmem:[%s290 + $0x70] sm:$0xff]
      %v319 = vld [vmem:[%s290 + $0x78] sm:$0xff]
      %v320 = vld [vmem:[%s2] sm:$0xff]
      %v321 = vld [vmem:[%s2 + $0x8] sm:$0xff]
      %v322 = vld [vmem:[%s2 + $0x10] sm:$0xff]
      %v323 = vld [vmem:[%s2 + $0x18] sm:$0xff]
      %v324 = vld [vmem:[%s3] sm:$0x1]
      %v326 = vlaneseq
      %v327 = vshrl.u32 %v326, 7
      %v328 = vsub.s32 0, %v327
      %v329 = vrot.slane %v324, %v328
      %vm331 = vcmask 261120
      %v333 = vsel %vm331, %v304, 0
      %v336 = vsel %vm331, %v305, 0
      %v339 = vsel %vm331, %v306, 0
      %v342 = vsel %vm331, %v307, 0
      %v345 = vsel %vm331, %v308, 0
      %v348 = vsel %vm331, %v309, 0
      %v351 = vsel %vm331, %v310, 0
      %v354 = vsel %vm331, %v311, 0
      %v357 = vsel %vm331, %v312, 0
      %v360 = vsel %vm331, %v313, 0
      %v363 = vsel %vm331, %v314, 0
      %v366 = vsel %vm331, %v315, 0
      %v369 = vsel %vm331, %v316, 0
      %v372 = vsel %vm331, %v317, 0
      %v375 = vsel %vm331, %v318, 0
      %v378 = vsel %vm331, %v319, 0
      %380 = vmatprep.subr.mxu0 0.0
      %381 = vmatpush1.msra.mxu0 0.0
      %382 = vmatprep.subr.mxu0 0.0
      %383 = vmatpush1.msra.mxu0 0.0
      %384 = vmatprep.subr.mxu0 0.0
      %385 = vmatpush1.msra.mxu0 0.0
      %386 = vmatprep.subr.mxu0 0.0
      %387 = vmatpush1.msra.mxu0 0.0
      %388 = vmatprep.subr.mxu0 0.0
      %389 = vmatpush1.msra.mxu0 0.0
      %390 = vmatprep.subr.mxu0 0.0
      %391 = vmatpush1.msra.mxu0 0.0
      %392 = vmatprep.subr.mxu0 0.0
      %393 = vmatpush1.msra.mxu0 0.0
      %394 = vmatprep.subr.mxu0 0.0
      %395 = vmatpush1.msra.mxu0 0.0
      %396 = vmatprep.subr.mxu0 0.0
      %397 = vmatpush1.msra.mxu0 0.0
      %398 = vmatprep.subr.mxu0 0.0
      %399 = vmatpush1.msra.mxu0 0.0
      %400 = vmatprep.subr.mxu0 0.0
      %401 = vmatpush1.msra.mxu0 0.0
      %402 = vmatprep.subr.mxu0 0.0
      %403 = vmatpush1.msra.mxu0 0.0
      %404 = vmatprep.subr.mxu0 0.0
      %405 = vmatpush1.msra.mxu0 %v323
      %406 = vmatprep.subr.mxu0 0.0
      %407 = vmatpush1.msra.mxu0 %v322
      %408 = vmatprep.subr.mxu0 0.0
      %409 = vmatpush1.msra.mxu0 %v321
      %410 = vmatprep.subr.mxu0 0.0
      %411 = vmatpush1.msra.mxu0 %v320
      %412 = vmatprep.subr.mxu0 0.0
      %413 = vmatpush2.msra.mxu0 0.0
      %414 = vmatprep.subr.mxu0 0.0
      %415 = vmatpush2.msra.mxu0 0.0
      %416 = vmatprep.subr.mxu0 0.0
      %417 = vmatpush2.msra.mxu0 0.0
      %418 = vmatprep.subr.mxu0 0.0
      %419 = vmatpush2.msra.mxu0 0.0
      %420 = vmatprep.subr.mxu0 0.0
      %421 = vmatpush2.msra.mxu0 0.0
      %422 = vmatprep.subr.mxu0 0.0
      %423 = vmatpush2.msra.mxu0 0.0
      %424 = vmatprep.subr.mxu0 0.0
      %425 = vmatpush2.msra.mxu0 0.0
      %426 = vmatprep.subr.mxu0 0.0
      %427 = vmatpush2.msra.mxu0 0.0
      %428 = vmatprep.subr.mxu0 0.0
      %429 = vmatpush2.msra.mxu0 0.0
      %430 = vmatprep.subr.mxu0 0.0
      %431 = vmatpush2.msra.mxu0 0.0
      %432 = vmatprep.subr.mxu0 0.0
      %433 = vmatpush2.msra.mxu0 0.0
      %434 = vmatprep.subr.mxu0 0.0
      %435 = vmatpush2.msra.mxu0 0.0
      %436 = vmatprep.subr.mxu0 0.0
      %437 = vmatpush2.msra.mxu0 0.0
      %438 = vmatprep.subr.mxu0 0.0
      %439 = vmatpush2.msra.mxu0 0.0
      %440 = vmatprep.subr.mxu0 0.0
      %441 = vmatpush2.msra.mxu0 0.0
      %442 = vmatprep.subr.mxu0 0.0
      %443 = vmatpush2.msra.mxu0 0.0
      %444 = vmatprep.mubr.f32.mxu0 0.0
      %445 = vmatmul.mubr.f32.gmra.mxu0 %v333
      %v446 = vpop.f32.mrf.mxu0
      %v447 = vadd.f32 %v329, %v446
      %v448 = vpop.f32.mrf.mxu0
      %449 = vmatprep.mubr.f32.mxu0 0.0
      %450 = vmatmul.mubr.f32.gmra.mxu0 %v336
      %v451 = vpop.f32.mrf.mxu0
      %v452 = vadd.f32 %v329, %v451
      %v453 = vpop.f32.mrf.mxu0
      %454 = vmatprep.mubr.f32.mxu0 0.0
      %455 = vmatmul.mubr.f32.gmra.mxu0 %v339
      %v456 = vpop.f32.mrf.mxu0
      %v457 = vadd.f32 %v329, %v456
      %v458 = vpop.f32.mrf.mxu0
      %459 = vmatprep.mubr.f32.mxu0 0.0
      %460 = vmatmul.mubr.f32.gmra.mxu0 %v342
      %v461 = vpop.f32.mrf.mxu0
      %v462 = vadd.f32 %v329, %v461
      %v463 = vpop.f32.mrf.mxu0
      %464 = vmatprep.mubr.f32.mxu0 0.0
      %465 = vmatmul.mubr.f32.gmra.mxu0 %v345
      %v466 = vpop.f32.mrf.mxu0
      %v467 = vadd.f32 %v329, %v466
      %v468 = vpop.f32.mrf.mxu0
      %469 = vmatprep.mubr.f32.mxu0 0.0
      %470 = vmatmul.mubr.f32.gmra.mxu0 %v348
      %v471 = vpop.f32.mrf.mxu0
      %v472 = vadd.f32 %v329, %v471
      %v473 = vpop.f32.mrf.mxu0
      %474 = vmatprep.mubr.f32.mxu0 0.0
      %475 = vmatmul.mubr.f32.gmra.mxu0 %v351
      %v476 = vpop.f32.mrf.mxu0
      %v477 = vadd.f32 %v329, %v476
      %v478 = vpop.f32.mrf.mxu0
      %479 = vmatprep.mubr.f32.mxu0 0.0
      %480 = vmatmul.mubr.f32.gmra.mxu0 %v354
      %v481 = vpop.f32.mrf.mxu0
      %v482 = vadd.f32 %v329, %v481
      %v483 = vpop.f32.mrf.mxu0
      %484 = vmatprep.mubr.f32.mxu0 0.0
      %485 = vmatmul.mubr.f32.gmra.mxu0 %v357
      %v486 = vpop.f32.mrf.mxu0
      %v487 = vadd.f32 %v329, %v486
      %v488 = vpop.f32.mrf.mxu0
      %489 = vmatprep.mubr.f32.mxu0 0.0
      %490 = vmatmul.mubr.f32.gmra.mxu0 %v360
      %v491 = vpop.f32.mrf.mxu0
      %v492 = vadd.f32 %v329, %v491
      %v493 = vpop.f32.mrf.mxu0
      %494 = vmatprep.mubr.f32.mxu0 0.0
      %495 = vmatmul.mubr.f32.gmra.mxu0 %v363
      %v496 = vpop.f32.mrf.mxu0
      %v497 = vadd.f32 %v329, %v496
      %v498 = vpop.f32.mrf.mxu0
      %499 = vmatprep.mubr.f32.mxu0 0.0
      %500 = vmatmul.mubr.f32.gmra.mxu0 %v366
      %v501 = vpop.f32.mrf.mxu0
      %v502 = vadd.f32 %v329, %v501
      %v503 = vpop.f32.mrf.mxu0
      %504 = vmatprep.mubr.f32.mxu0 0.0
      %505 = vmatmul.mubr.f32.gmra.mxu0 %v369
      %v506 = vpop.f32.mrf.mxu0
      %v507 = vadd.f32 %v329, %v506
      %v508 = vpop.f32.mrf.mxu0
      %509 = vmatprep.mubr.f32.mxu0 0.0
      %510 = vmatmul.mubr.f32.gmra.mxu0 %v372
      %v511 = vpop.f32.mrf.mxu0
      %v512 = vadd.f32 %v329, %v511
      %v513 = vpop.f32.mrf.mxu0
      %514 = vmatprep.mubr.f32.mxu0 0.0
      %515 = vmatmul.mubr.f32.gmra.mxu0 %v375
      %v516 = vpop.f32.mrf.mxu0
      %v517 = vadd.f32 %v329, %v516
      %v518 = vpop.f32.mrf.mxu0
      %519 = vmatprep.mubr.f32.mxu0 0.0
      %520 = vmatmul.mubr.f32.gmra.mxu0 %v378
      %v521 = vpop.f32.mrf.mxu0
      %v522 = vadd.f32 %v329, %v521
      %v523 = vpop.f32.mrf.mxu0
      %524 = vdwg.mxu0
      %v525 = vmax.f32 %v447, 0.0
      %v526 = vmax.f32 %v452, 0.0
      %v527 = vmax.f32 %v457, 0.0
      %v528 = vmax.f32 %v462, 0.0
      %v529 = vmax.f32 %v467, 0.0
      %v530 = vmax.f32 %v472, 0.0
      %v531 = vmax.f32 %v477, 0.0
      %v532 = vmax.f32 %v482, 0.0
      %v533 = vmax.f32 %v487, 0.0
      %v534 = vmax.f32 %v492, 0.0
      %v535 = vmax.f32 %v497, 0.0
      %v536 = vmax.f32 %v502, 0.0
      %v537 = vmax.f32 %v507, 0.0
      %v538 = vmax.f32 %v512, 0.0
      %v539 = vmax.f32 %v517, 0.0
      %v540 = vmax.f32 %v522, 0.0
      %v541 = vld [vmem:[%s4] sm:$0xff]
      %v542 = vld [vmem:[%s4 + $0x8] sm:$0xff]
      %v543 = vld [vmem:[%s4 + $0x10] sm:$0xff]
      %v544 = vld [vmem:[%s4 + $0x18] sm:$0xff]
      %v545 = vld [vmem:[%s5] sm:$0x1]
      %v547 = vlaneseq
      %v548 = vshrl.u32 %v547, 7
      %v549 = vsub.s32 0, %v548
      %v550 = vrot.slane %v545, %v549
      %v553 = vsel %vm331, %v525, 0
      %v556 = vsel %vm331, %v526, 0
      %v559 = vsel %vm331, %v527, 0
      %v562 = vsel %vm331, %v528, 0
      %v565 = vsel %vm331, %v529, 0
      %v568 = vsel %vm331, %v530, 0
      %v571 = vsel %vm331, %v531, 0
      %v574 = vsel %vm331, %v532, 0
      %v577 = vsel %vm331, %v533, 0
      %v580 = vsel %vm331, %v534, 0
      %v583 = vsel %vm331, %v535, 0
      %v586 = vsel %vm331, %v536, 0
      %v589 = vsel %vm331, %v537, 0
      %v592 = vsel %vm331, %v538, 0
      %v595 = vsel %vm331, %v539, 0
      %v598 = vsel %vm331, %v540, 0
      %600 = vmatprep.subr.mxu0 0.0
      %601 = vmatpush1.msra.mxu0 0.0
      %602 = vmatprep.subr.mxu0 0.0
      %603 = vmatpush1.msra.mxu0 0.0
      %604 = vmatprep.subr.mxu0 0.0
      %605 = vmatpush1.msra.mxu0 0.0
      %606 = vmatprep.subr.mxu0 0.0
      %607 = vmatpush1.msra.mxu0 0.0
      %608 = vmatprep.subr.mxu0 0.0
      %609 = vmatpush1.msra.mxu0 0.0
      %610 = vmatprep.subr.mxu0 0.0
      %611 = vmatpush1.msra.mxu0 0.0
      %612 = vmatprep.subr.mxu0 0.0
      %613 = vmatpush1.msra.mxu0 0.0
      %614 = vmatprep.subr.mxu0 0.0
      %615 = vmatpush1.msra.mxu0 0.0
      %616 = vmatprep.subr.mxu0 0.0
      %617 = vmatpush1.msra.mxu0 0.0
      %618 = vmatprep.subr.mxu0 0.0
      %619 = vmatpush1.msra.mxu0 0.0
      %620 = vmatprep.subr.mxu0 0.0
      %621 = vmatpush1.msra.mxu0 0.0
      %622 = vmatprep.subr.mxu0 0.0
      %623 = vmatpush1.msra.mxu0 0.0
      %624 = vmatprep.subr.mxu0 0.0
      %625 = vmatpush1.msra.mxu0 %v544
      %626 = vmatprep.subr.mxu0 0.0
      %627 = vmatpush1.msra.mxu0 %v543
      %628 = vmatprep.subr.mxu0 0.0
      %629 = vmatpush1.msra.mxu0 %v542
      %630 = vmatprep.subr.mxu0 0.0
      %631 = vmatpush1.msra.mxu0 %v541
      %632 = vmatprep.subr.mxu0 0.0
      %633 = vmatpush2.msra.mxu0 0.0
      %634 = vmatprep.subr.mxu0 0.0
      %635 = vmatpush2.msra.mxu0 0.0
      %636 = vmatprep.subr.mxu0 0.0
      %637 = vmatpush2.msra.mxu0 0.0
      %638 = vmatprep.subr.mxu0 0.0
      %639 = vmatpush2.msra.mxu0 0.0
      %640 = vmatprep.subr.mxu0 0.0
      %641 = vmatpush2.msra.mxu0 0.0
      %642 = vmatprep.subr.mxu0 0.0
      %643 = vmatpush2.msra.mxu0 0.0
      %644 = vmatprep.subr.mxu0 0.0
      %645 = vmatpush2.msra.mxu0 0.0
      %646 = vmatprep.subr.mxu0 0.0
      %647 = vmatpush2.msra.mxu0 0.0
      %648 = vmatprep.subr.mxu0 0.0
      %649 = vmatpush2.msra.mxu0 0.0
      %650 = vmatprep.subr.mxu0 0.0
      %651 = vmatpush2.msra.mxu0 0.0
      %652 = vmatprep.subr.mxu0 0.0
      %653 = vmatpush2.msra.mxu0 0.0
      %654 = vmatprep.subr.mxu0 0.0
      %655 = vmatpush2.msra.mxu0 0.0
      %656 = vmatprep.subr.mxu0 0.0
      %657 = vmatpush2.msra.mxu0 0.0
      %658 = vmatprep.subr.mxu0 0.0
      %659 = vmatpush2.msra.mxu0 0.0
      %660 = vmatprep.subr.mxu0 0.0
      %661 = vmatpush2.msra.mxu0 0.0
      %662 = vmatprep.subr.mxu0 0.0
      %663 = vmatpush2.msra.mxu0 0.0
      %664 = vmatprep.mubr.f32.mxu0 0.0
      %665 = vmatmul.mubr.f32.gmra.mxu0 %v553
      %v666 = vpop.f32.mrf.mxu0
      %v667 = vadd.f32 %v550, %v666
      %v668 = vpop.f32.mrf.mxu0
      %669 = vmatprep.mubr.f32.mxu0 0.0
      %670 = vmatmul.mubr.f32.gmra.mxu0 %v556
      %v671 = vpop.f32.mrf.mxu0
      %v672 = vadd.f32 %v550, %v671
      %v673 = vpop.f32.mrf.mxu0
      %674 = vmatprep.mubr.f32.mxu0 0.0
      %675 = vmatmul.mubr.f32.gmra.mxu0 %v559
      %v676 = vpop.f32.mrf.mxu0
      %v677 = vadd.f32 %v550, %v676
      %v678 = vpop.f32.mrf.mxu0
      %679 = vmatprep.mubr.f32.mxu0 0.0
      %680 = vmatmul.mubr.f32.gmra.mxu0 %v562
      %v681 = vpop.f32.mrf.mxu0
      %v682 = vadd.f32 %v550, %v681
      %v683 = vpop.f32.mrf.mxu0
      %684 = vmatprep.mubr.f32.mxu0 0.0
      %685 = vmatmul.mubr.f32.gmra.mxu0 %v565
      %v686 = vpop.f32.mrf.mxu0
      %v687 = vadd.f32 %v550, %v686
      %v688 = vpop.f32.mrf.mxu0
      %689 = vmatprep.mubr.f32.mxu0 0.0
      %690 = vmatmul.mubr.f32.gmra.mxu0 %v568
      %v691 = vpop.f32.mrf.mxu0
      %v692 = vadd.f32 %v550, %v691
      %v693 = vpop.f32.mrf.mxu0
      %694 = vmatprep.mubr.f32.mxu0 0.0
      %695 = vmatmul.mubr.f32.gmra.mxu0 %v571
      %v696 = vpop.f32.mrf.mxu0
      %v697 = vadd.f32 %v550, %v696
      %v698 = vpop.f32.mrf.mxu0
      %699 = vmatprep.mubr.f32.mxu0 0.0
      %700 = vmatmul.mubr.f32.gmra.mxu0 %v574
      %v701 = vpop.f32.mrf.mxu0
      %v702 = vadd.f32 %v550, %v701
      %v703 = vpop.f32.mrf.mxu0
      %704 = vmatprep.mubr.f32.mxu0 0.0
      %705 = vmatmul.mubr.f32.gmra.mxu0 %v577
      %v706 = vpop.f32.mrf.mxu0
      %v707 = vadd.f32 %v550, %v706
      %v708 = vpop.f32.mrf.mxu0
      %709 = vmatprep.mubr.f32.mxu0 0.0
      %710 = vmatmul.mubr.f32.gmra.mxu0 %v580
      %v711 = vpop.f32.mrf.mxu0
      %v712 = vadd.f32 %v550, %v711
      %v713 = vpop.f32.mrf.mxu0
      %714 = vmatprep.mubr.f32.mxu0 0.0
      %715 = vmatmul.mubr.f32.gmra.mxu0 %v583
      %v716 = vpop.f32.mrf.mxu0
      %v717 = vadd.f32 %v550, %v716
      %v718 = vpop.f32.mrf.mxu0
      %719 = vmatprep.mubr.f32.mxu0 0.0
      %720 = vmatmul.mubr.f32.gmra.mxu0 %v586
      %v721 = vpop.f32.mrf.mxu0
      %v722 = vadd.f32 %v550, %v721
      %v723 = vpop.f32.mrf.mxu0
      %724 = vmatprep.mubr.f32.mxu0 0.0
      %725 = vmatmul.mubr.f32.gmra.mxu0 %v589
      %v726 = vpop.f32.mrf.mxu0
      %v727 = vadd.f32 %v550, %v726
      %v728 = vpop.f32.mrf.mxu0
      %729 = vmatprep.mubr.f32.mxu0 0.0
      %730 = vmatmul.mubr.f32.gmra.mxu0 %v592
      %v731 = vpop.f32.mrf.mxu0
      %v732 = vadd.f32 %v550, %v731
      %v733 = vpop.f32.mrf.mxu0
      %734 = vmatprep.mubr.f32.mxu0 0.0
      %735 = vmatmul.mubr.f32.gmra.mxu0 %v595
      %v736 = vpop.f32.mrf.mxu0
      %v737 = vadd.f32 %v550, %v736
      %v738 = vpop.f32.mrf.mxu0
      %739 = vmatprep.mubr.f32.mxu0 0.0
      %740 = vmatmul.mubr.f32.gmra.mxu0 %v598
      %v741 = vpop.f32.mrf.mxu0
      %v742 = vadd.f32 %v550, %v741
      %v743 = vpop.f32.mrf.mxu0
      %744 = vdwg.mxu0
      %v745 = vld [vmem:[%s296] sm:$0xff]
      %v746 = vld [vmem:[%s296 + $0x8] sm:$0xff]
      %v747 = vld [vmem:[%s296 + $0x10] sm:$0xff]
      %v748 = vld [vmem:[%s296 + $0x18] sm:$0xff]
      %v749 = vld [vmem:[%s296 + $0x20] sm:$0xff]
      %v750 = vld [vmem:[%s296 + $0x28] sm:$0xff]
      %v751 = vld [vmem:[%s296 + $0x30] sm:$0xff]
      %v752 = vld [vmem:[%s296 + $0x38] sm:$0xff]
      %v753 = vld [vmem:[%s296 + $0x40] sm:$0xff]
      %v754 = vld [vmem:[%s296 + $0x48] sm:$0xff]
      %v755 = vld [vmem:[%s296 + $0x50] sm:$0xff]
      %v756 = vld [vmem:[%s296 + $0x58] sm:$0xff]
      %v757 = vld [vmem:[%s296 + $0x60] sm:$0xff]
      %v758 = vld [vmem:[%s296 + $0x68] sm:$0xff]
      %v759 = vld [vmem:[%s296 + $0x70] sm:$0xff]
      %v760 = vld [vmem:[%s296 + $0x78] sm:$0xff]
      %v761 = vmul.f32 %v745, %v745
      %v762 = vmul.f32 %v746, %v746
      %v763 = vmul.f32 %v747, %v747
      %v764 = vmul.f32 %v748, %v748
      %v765 = vmul.f32 %v749, %v749
      %v766 = vmul.f32 %v750, %v750
      %v767 = vmul.f32 %v751, %v751
      %v768 = vmul.f32 %v752, %v752
      %v769 = vmul.f32 %v753, %v753
      %v770 = vmul.f32 %v754, %v754
      %v771 = vmul.f32 %v755, %v755
      %v772 = vmul.f32 %v756, %v756
      %v773 = vmul.f32 %v757, %v757
      %v774 = vmul.f32 %v758, %v758
      %v775 = vmul.f32 %v759, %v759
      %v776 = vmul.f32 %v760, %v760
      %vm777 = vcmask 23552
      %v778 = vsel %vm777, %v761, 0.0
      %779 = vadd.xlane.f32.xlu0 %v778
      %v780 = vpop.xlane.xlu0 %779
      %v781 = vsel %vm777, %v762, 0.0
      %782 = vadd.xlane.f32.xlu0 %v781
      %v783 = vpop.xlane.xlu0 %782
      %v784 = vsel %vm777, %v763, 0.0
      %785 = vadd.xlane.f32.xlu0 %v784
      %v786 = vpop.xlane.xlu0 %785
      %v787 = vsel %vm777, %v764, 0.0
      %788 = vadd.xlane.f32.xlu0 %v787
      %v789 = vpop.xlane.xlu0 %788
      %v790 = vsel %vm777, %v765, 0.0
      %791 = vadd.xlane.f32.xlu0 %v790
      %v792 = vpop.xlane.xlu0 %791
      %v793 = vsel %vm777, %v766, 0.0
      %794 = vadd.xlane.f32.xlu0 %v793
      %v795 = vpop.xlane.xlu0 %794
      %v796 = vsel %vm777, %v767, 0.0
      %797 = vadd.xlane.f32.xlu0 %v796
      %v798 = vpop.xlane.xlu0 %797
      %v799 = vsel %vm777, %v768, 0.0
      %800 = vadd.xlane.f32.xlu0 %v799
      %v801 = vpop.xlane.xlu0 %800
      %v802 = vsel %vm777, %v769, 0.0
      %803 = vadd.xlane.f32.xlu0 %v802
      %v804 = vpop.xlane.xlu0 %803
      %v805 = vsel %vm777, %v770, 0.0
      %806 = vadd.xlane.f32.xlu0 %v805
      %v807 = vpop.xlane.xlu0 %806
      %v808 = vsel %vm777, %v771, 0.0
      %809 = vadd.xlane.f32.xlu0 %v808
      %v810 = vpop.xlane.xlu0 %809
      %v811 = vsel %vm777, %v772, 0.0
      %812 = vadd.xlane.f32.xlu0 %v811
      %v813 = vpop.xlane.xlu0 %812
      %v814 = vsel %vm777, %v773, 0.0
      %815 = vadd.xlane.f32.xlu0 %v814
      %v816 = vpop.xlane.xlu0 %815
      %v817 = vsel %vm777, %v774, 0.0
      %818 = vadd.xlane.f32.xlu0 %v817
      %v819 = vpop.xlane.xlu0 %818
      %v820 = vsel %vm777, %v775, 0.0
      %821 = vadd.xlane.f32.xlu0 %v820
      %v822 = vpop.xlane.xlu0 %821
      %v823 = vsel %vm777, %v776, 0.0
      %824 = vadd.xlane.f32.xlu0 %v823
      %v825 = vpop.xlane.xlu0 %824
      %v826 = vmax.f32 %v780, 1e-08
      %v827 = vmax.f32 %v783, 1e-08
      %v828 = vmax.f32 %v786, 1e-08
      %v829 = vmax.f32 %v789, 1e-08
      %v830 = vmax.f32 %v792, 1e-08
      %v831 = vmax.f32 %v795, 1e-08
      %v832 = vmax.f32 %v798, 1e-08
      %v833 = vmax.f32 %v801, 1e-08
      %v834 = vmax.f32 %v804, 1e-08
      %v835 = vmax.f32 %v807, 1e-08
      %v836 = vmax.f32 %v810, 1e-08
      %v837 = vmax.f32 %v813, 1e-08
      %v838 = vmax.f32 %v816, 1e-08
      %v839 = vmax.f32 %v819, 1e-08
      %v840 = vmax.f32 %v822, 1e-08
      %v841 = vmax.f32 %v825, 1e-08
      %v842 = vrsqrt.pop %v826
      %v843 = vrsqrt.pop %v827
      %v844 = vrsqrt.pop %v828
      %v845 = vrsqrt.pop %v829
      %v846 = vrsqrt.pop %v830
      %v847 = vrsqrt.pop %v831
      %v848 = vrsqrt.pop %v832
      %v849 = vrsqrt.pop %v833
      %v850 = vrsqrt.pop %v834
      %v851 = vrsqrt.pop %v835
      %v852 = vrsqrt.pop %v836
      %v853 = vrsqrt.pop %v837
      %v854 = vrsqrt.pop %v838
      %v855 = vrsqrt.pop %v839
      %v856 = vrsqrt.pop %v840
      %v857 = vrsqrt.pop %v841
      %v858 = vmul.f32 %v745, %v842
      %v859 = vmul.f32 %v746, %v843
      %v860 = vmul.f32 %v747, %v844
      %v861 = vmul.f32 %v748, %v845
      %v862 = vmul.f32 %v749, %v846
      %v863 = vmul.f32 %v750, %v847
      %v864 = vmul.f32 %v751, %v848
      %v865 = vmul.f32 %v752, %v849
      %v866 = vmul.f32 %v753, %v850
      %v867 = vmul.f32 %v754, %v851
      %v868 = vmul.f32 %v755, %v852
      %v869 = vmul.f32 %v756, %v853
      %v870 = vmul.f32 %v757, %v854
      %v871 = vmul.f32 %v758, %v855
      %v872 = vmul.f32 %v759, %v856
      %v873 = vmul.f32 %v760, %v857
      %v874 = vld [vmem:[%s6] sm:$0x7]
      %v876 = vsel %vm777, %v858, 0
      %v879 = vsel %vm777, %v859, 0
      %v882 = vsel %vm777, %v860, 0
      %v885 = vsel %vm777, %v861, 0
      %v888 = vsel %vm777, %v862, 0
      %v891 = vsel %vm777, %v863, 0
      %v894 = vsel %vm777, %v864, 0
      %v897 = vsel %vm777, %v865, 0
      %v900 = vsel %vm777, %v866, 0
      %v903 = vsel %vm777, %v867, 0
      %v906 = vsel %vm777, %v868, 0
      %v909 = vsel %vm777, %v869, 0
      %v912 = vsel %vm777, %v870, 0
      %v915 = vsel %vm777, %v871, 0
      %v918 = vsel %vm777, %v872, 0
      %v921 = vsel %vm777, %v873, 0
      %vm923 = vcmask 1042432
      %v925 = vsel %vm923, %v874, 0
      %927 = vmatprep.subr.mxu0 0.0
      %928 = vmatpush1.msra.mxu0 0.0
      %929 = vmatprep.subr.mxu0 0.0
      %930 = vmatpush1.msra.mxu0 0.0
      %931 = vmatprep.subr.mxu0 0.0
      %932 = vmatpush1.msra.mxu0 0.0
      %933 = vmatprep.subr.mxu0 0.0
      %934 = vmatpush1.msra.mxu0 0.0
      %935 = vmatprep.subr.mxu0 0.0
      %936 = vmatpush1.msra.mxu0 0.0
      %937 = vmatprep.subr.mxu0 0.0
      %938 = vmatpush1.msra.mxu0 0.0
      %939 = vmatprep.subr.mxu0 0.0
      %940 = vmatpush1.msra.mxu0 0.0
      %941 = vmatprep.subr.mxu0 0.0
      %942 = vmatpush1.msra.mxu0 0.0
      %943 = vmatprep.subr.mxu0 0.0
      %944 = vmatpush1.msra.mxu0 0.0
      %945 = vmatprep.subr.mxu0 0.0
      %946 = vmatpush1.msra.mxu0 0.0
      %947 = vmatprep.subr.mxu0 0.0
      %948 = vmatpush1.msra.mxu0 0.0
      %949 = vmatprep.subr.mxu0 0.0
      %950 = vmatpush1.msra.mxu0 0.0
      %951 = vmatprep.subr.mxu0 0.0
      %952 = vmatpush1.msra.mxu0 0.0
      %953 = vmatprep.subr.mxu0 0.0
      %954 = vmatpush1.msra.mxu0 0.0
      %955 = vmatprep.subr.mxu0 0.0
      %956 = vmatpush1.msra.mxu0 0.0
      %957 = vmatprep.subr.mxu0 0.0
      %958 = vmatpush1.msra.mxu0 %v925
      %959 = vmatprep.subr.mxu0 0.0
      %960 = vmatpush2.msra.mxu0 0.0
      %961 = vmatprep.subr.mxu0 0.0
      %962 = vmatpush2.msra.mxu0 0.0
      %963 = vmatprep.subr.mxu0 0.0
      %964 = vmatpush2.msra.mxu0 0.0
      %965 = vmatprep.subr.mxu0 0.0
      %966 = vmatpush2.msra.mxu0 0.0
      %967 = vmatprep.subr.mxu0 0.0
      %968 = vmatpush2.msra.mxu0 0.0
      %969 = vmatprep.subr.mxu0 0.0
      %970 = vmatpush2.msra.mxu0 0.0
      %971 = vmatprep.subr.mxu0 0.0
      %972 = vmatpush2.msra.mxu0 0.0
      %973 = vmatprep.subr.mxu0 0.0
      %974 = vmatpush2.msra.mxu0 0.0
      %975 = vmatprep.subr.mxu0 0.0
      %976 = vmatpush2.msra.mxu0 0.0
      %977 = vmatprep.subr.mxu0 0.0
      %978 = vmatpush2.msra.mxu0 0.0
      %979 = vmatprep.subr.mxu0 0.0
      %980 = vmatpush2.msra.mxu0 0.0
      %981 = vmatprep.subr.mxu0 0.0
      %982 = vmatpush2.msra.mxu0 0.0
      %983 = vmatprep.subr.mxu0 0.0
      %984 = vmatpush2.msra.mxu0 0.0
      %985 = vmatprep.subr.mxu0 0.0
      %986 = vmatpush2.msra.mxu0 0.0
      %987 = vmatprep.subr.mxu0 0.0
      %988 = vmatpush2.msra.mxu0 0.0
      %989 = vmatprep.subr.mxu0 0.0
      %990 = vmatpush2.msra.mxu0 0.0
      %991 = vmatprep.mubr.f32.mxu0 0.0
      %992 = vmatmul.mubr.f32.gmra.mxu0 %v876
      %v993 = vpop.f32.mrf.mxu0
      %v994 = vadd.f32 0.0, %v993
      %v995 = vpop.f32.mrf.mxu0
      %996 = vmatprep.mubr.f32.mxu0 0.0
      %997 = vmatmul.mubr.f32.gmra.mxu0 %v879
      %v998 = vpop.f32.mrf.mxu0
      %v999 = vadd.f32 0.0, %v998
      %v1000 = vpop.f32.mrf.mxu0
      %1001 = vmatprep.mubr.f32.mxu0 0.0
      %1002 = vmatmul.mubr.f32.gmra.mxu0 %v882
      %v1003 = vpop.f32.mrf.mxu0
      %v1004 = vadd.f32 0.0, %v1003
      %v1005 = vpop.f32.mrf.mxu0
      %1006 = vmatprep.mubr.f32.mxu0 0.0
      %1007 = vmatmul.mubr.f32.gmra.mxu0 %v885
      %v1008 = vpop.f32.mrf.mxu0
      %v1009 = vadd.f32 0.0, %v1008
      %v1010 = vpop.f32.mrf.mxu0
      %1011 = vmatprep.mubr.f32.mxu0 0.0
      %1012 = vmatmul.mubr.f32.gmra.mxu0 %v888
      %v1013 = vpop.f32.mrf.mxu0
      %v1014 = vadd.f32 0.0, %v1013
      %v1015 = vpop.f32.mrf.mxu0
      %1016 = vmatprep.mubr.f32.mxu0 0.0
      %1017 = vmatmul.mubr.f32.gmra.mxu0 %v891
      %v1018 = vpop.f32.mrf.mxu0
      %v1019 = vadd.f32 0.0, %v1018
      %v1020 = vpop.f32.mrf.mxu0
      %1021 = vmatprep.mubr.f32.mxu0 0.0
      %1022 = vmatmul.mubr.f32.gmra.mxu0 %v894
      %v1023 = vpop.f32.mrf.mxu0
      %v1024 = vadd.f32 0.0, %v1023
      %v1025 = vpop.f32.mrf.mxu0
      %1026 = vmatprep.mubr.f32.mxu0 0.0
      %1027 = vmatmul.mubr.f32.gmra.mxu0 %v897
      %v1028 = vpop.f32.mrf.mxu0
      %v1029 = vadd.f32 0.0, %v1028
      %v1030 = vpop.f32.mrf.mxu0
      %1031 = vmatprep.mubr.f32.mxu0 0.0
      %1032 = vmatmul.mubr.f32.gmra.mxu0 %v900
      %v1033 = vpop.f32.mrf.mxu0
      %v1034 = vadd.f32 0.0, %v1033
      %v1035 = vpop.f32.mrf.mxu0
      %1036 = vmatprep.mubr.f32.mxu0 0.0
      %1037 = vmatmul.mubr.f32.gmra.mxu0 %v903
      %v1038 = vpop.f32.mrf.mxu0
      %v1039 = vadd.f32 0.0, %v1038
      %v1040 = vpop.f32.mrf.mxu0
      %1041 = vmatprep.mubr.f32.mxu0 0.0
      %1042 = vmatmul.mubr.f32.gmra.mxu0 %v906
      %v1043 = vpop.f32.mrf.mxu0
      %v1044 = vadd.f32 0.0, %v1043
      %v1045 = vpop.f32.mrf.mxu0
      %1046 = vmatprep.mubr.f32.mxu0 0.0
      %1047 = vmatmul.mubr.f32.gmra.mxu0 %v909
      %v1048 = vpop.f32.mrf.mxu0
      %v1049 = vadd.f32 0.0, %v1048
      %v1050 = vpop.f32.mrf.mxu0
      %1051 = vmatprep.mubr.f32.mxu0 0.0
      %1052 = vmatmul.mubr.f32.gmra.mxu0 %v912
      %v1053 = vpop.f32.mrf.mxu0
      %v1054 = vadd.f32 0.0, %v1053
      %v1055 = vpop.f32.mrf.mxu0
      %1056 = vmatprep.mubr.f32.mxu0 0.0
      %1057 = vmatmul.mubr.f32.gmra.mxu0 %v915
      %v1058 = vpop.f32.mrf.mxu0
      %v1059 = vadd.f32 0.0, %v1058
      %v1060 = vpop.f32.mrf.mxu0
      %1061 = vmatprep.mubr.f32.mxu0 0.0
      %1062 = vmatmul.mubr.f32.gmra.mxu0 %v918
      %v1063 = vpop.f32.mrf.mxu0
      %v1064 = vadd.f32 0.0, %v1063
      %v1065 = vpop.f32.mrf.mxu0
      %1066 = vmatprep.mubr.f32.mxu0 0.0
      %1067 = vmatmul.mubr.f32.gmra.mxu0 %v921
      %v1068 = vpop.f32.mrf.mxu0
      %v1069 = vadd.f32 0.0, %v1068
      %v1070 = vpop.f32.mrf.mxu0
      %1071 = vdwg.mxu0
      %vm1072 = vcmp.lt.f32.partialorder %v780, 1e-16
      %vm1073 = vcmp.lt.f32.partialorder %v783, 1e-16
      %vm1074 = vcmp.lt.f32.partialorder %v786, 1e-16
      %vm1075 = vcmp.lt.f32.partialorder %v789, 1e-16
      %vm1076 = vcmp.lt.f32.partialorder %v792, 1e-16
      %vm1077 = vcmp.lt.f32.partialorder %v795, 1e-16
      %vm1078 = vcmp.lt.f32.partialorder %v798, 1e-16
      %vm1079 = vcmp.lt.f32.partialorder %v801, 1e-16
      %vm1080 = vcmp.lt.f32.partialorder %v804, 1e-16
      %vm1081 = vcmp.lt.f32.partialorder %v807, 1e-16
      %vm1082 = vcmp.lt.f32.partialorder %v810, 1e-16
      %vm1083 = vcmp.lt.f32.partialorder %v813, 1e-16
      %vm1084 = vcmp.lt.f32.partialorder %v816, 1e-16
      %vm1085 = vcmp.lt.f32.partialorder %v819, 1e-16
      %vm1086 = vcmp.lt.f32.partialorder %v822, 1e-16
      %vm1087 = vcmp.lt.f32.partialorder %v825, 1e-16
      %v1088 = vsel %vm1072, 0.0, 1.0
      %v1089 = vsel %vm1073, 0.0, 1.0
      %v1090 = vsel %vm1074, 0.0, 1.0
      %v1091 = vsel %vm1075, 0.0, 1.0
      %v1092 = vsel %vm1076, 0.0, 1.0
      %v1093 = vsel %vm1077, 0.0, 1.0
      %v1094 = vsel %vm1078, 0.0, 1.0
      %v1095 = vsel %vm1079, 0.0, 1.0
      %v1096 = vsel %vm1080, 0.0, 1.0
      %v1097 = vsel %vm1081, 0.0, 1.0
      %v1098 = vsel %vm1082, 0.0, 1.0
      %v1099 = vsel %vm1083, 0.0, 1.0
      %v1100 = vsel %vm1084, 0.0, 1.0
      %v1101 = vsel %vm1085, 0.0, 1.0
      %v1102 = vsel %vm1086, 0.0, 1.0
      %v1103 = vsel %vm1087, 0.0, 1.0
      %v1104 = vmul.f32 %v667, %v994
      %v1105 = vmul.f32 %v672, %v999
      %v1106 = vmul.f32 %v677, %v1004
      %v1107 = vmul.f32 %v682, %v1009
      %v1108 = vmul.f32 %v687, %v1014
      %v1109 = vmul.f32 %v692, %v1019
      %v1110 = vmul.f32 %v697, %v1024
      %v1111 = vmul.f32 %v702, %v1029
      %v1112 = vmul.f32 %v707, %v1034
      %v1113 = vmul.f32 %v712, %v1039
      %v1114 = vmul.f32 %v717, %v1044
      %v1115 = vmul.f32 %v722, %v1049
      %v1116 = vmul.f32 %v727, %v1054
      %v1117 = vmul.f32 %v732, %v1059
      %v1118 = vmul.f32 %v737, %v1064
      %v1119 = vmul.f32 %v742, %v1069
      %v1120 = vmul.f32 %v1104, %v1088
      %v1121 = vmul.f32 %v1105, %v1089
      %v1122 = vmul.f32 %v1106, %v1090
      %v1123 = vmul.f32 %v1107, %v1091
      %v1124 = vmul.f32 %v1108, %v1092
      %v1125 = vmul.f32 %v1109, %v1093
      %v1126 = vmul.f32 %v1110, %v1094
      %v1127 = vmul.f32 %v1111, %v1095
      %v1128 = vmul.f32 %v1112, %v1096
      %v1129 = vmul.f32 %v1113, %v1097
      %v1130 = vmul.f32 %v1114, %v1098
      %v1131 = vmul.f32 %v1115, %v1099
      %v1132 = vmul.f32 %v1116, %v1100
      %v1133 = vmul.f32 %v1117, %v1101
      %v1134 = vmul.f32 %v1118, %v1102
      %v1135 = vmul.f32 %v1119, %v1103
      %vm1136 = vcmask 97280
      %1137 = vst.msk [vmem:[%s302] sm:$0xff] %vm1136, %v1120
      %1138 = vst.msk [vmem:[%s302 + $0x8] sm:$0xff] %vm1136, %v1121
      %1139 = vst.msk [vmem:[%s302 + $0x10] sm:$0xff] %vm1136, %v1122
      %1140 = vst.msk [vmem:[%s302 + $0x18] sm:$0xff] %vm1136, %v1123
      %1141 = vst.msk [vmem:[%s302 + $0x20] sm:$0xff] %vm1136, %v1124
      %1142 = vst.msk [vmem:[%s302 + $0x28] sm:$0xff] %vm1136, %v1125
      %1143 = vst.msk [vmem:[%s302 + $0x30] sm:$0xff] %vm1136, %v1126
      %1144 = vst.msk [vmem:[%s302 + $0x38] sm:$0xff] %vm1136, %v1127
      %1145 = vst.msk [vmem:[%s302 + $0x40] sm:$0xff] %vm1136, %v1128
      %1146 = vst.msk [vmem:[%s302 + $0x48] sm:$0xff] %vm1136, %v1129
      %1147 = vst.msk [vmem:[%s302 + $0x50] sm:$0xff] %vm1136, %v1130
      %1148 = vst.msk [vmem:[%s302 + $0x58] sm:$0xff] %vm1136, %v1131
      %1149 = vst.msk [vmem:[%s302 + $0x60] sm:$0xff] %vm1136, %v1132
      %1150 = vst.msk [vmem:[%s302 + $0x68] sm:$0xff] %vm1136, %v1133
      %1151 = vst.msk [vmem:[%s302 + $0x70] sm:$0xff] %vm1136, %v1134
      %1152 = vst.msk [vmem:[%s302 + $0x78] sm:$0xff] %vm1136, %v1135
      %s1153 = smul.u32 16, %s18
      %p1154 = scmp.lt.s32.totalorder %s1153, 79
      %s1155 = scalar_select %p1154, %s1153, 79
      %s1156 = smul.addr %s1155, 8
      %s1157 = scalar_lea.vmem %s7, %s1156
      // Predicated region
      $region49: #{tpu_custom_call.1} parent=47 // pred_check
        %p1158 = pneg %p193
      $region50: #{tpu_custom_call.1} parent=47 // pred_check_branch
        %1160 = sbr.rel (%p1158) target = $region52
      $region51: #{tpu_custom_call.1} parent=47 // pred_region
        %s1161 = smul.u32 16, %s18
      $region52: #{tpu_custom_call.1} parent=47 // pred_fallthru
        _
    $region48: #{tpu_custom_call.1} parent=5 // pred_fallthru
      _
    %p1162 = scmp.le.s32.totalorder 2, %s13
    // Predicated region
    $region53: #{tpu_custom_call.1} parent=5 // pred_check
      %p1163 = pneg %p1162
    $region54: #{tpu_custom_call.1} parent=5 // pred_check_branch
      %1165 = sbr.rel (%p1163) target = $region56
    $region55: #{tpu_custom_call.1} parent=5 // pred_region
      %s1166 = ssub.s32 %s13, 2
      // Predicated region
      $region57: #{tpu_custom_call.1} parent=55 // pred_check
        %p1167 = pneg %p199
      $region58: #{tpu_custom_call.1} parent=55 // pred_check_branch
        %1169 = sbr.rel (%p1167) target = $region60
      $region59: #{tpu_custom_call.1} parent=55 // pred_region
        %s1170 = smul.u32 16, %s19
        %p1171 = scmp.lt.s32.totalorder %s1170, 79
        %s1172 = scalar_select %p1171, %s1170, 79
        %s1173 = smul.addr %s1172, 8
        %s1174 = scalar_lea.vmem %s7, %s1173
      $region60: #{tpu_custom_call.1} parent=55 // pred_fallthru
        _
    $region56: #{tpu_custom_call.1} parent=5 // pred_fallthru
      _
  $region6: #{tpu_custom_call.1} parent=0 // loop_footer
    %s17 = sadd.s32 1, %s13
  $region7: #{tpu_custom_call.1} parent=0 // loop_footer_branch
    %12 = sbr.rel target = $region3
  $region8: #{tpu_custom_call.1} parent=0 // loop_exit
    _

</llo_original>
